<compile_context>
chip_gen: v7x
topology: tpu7x:2x2x1
jax: 0.10.0
libtpu: 0.0.40
codegen_flags: <defaults>
</compile_context>

<pallas_src>
import functools

import jax
import jax.numpy as jnp
from jax import lax
from jax.experimental import pallas as pl
from jax.experimental.pallas import tpu as pltpu


def _round_up(x, m):
    return (x + m - 1) // m * m


def _vmem_budget_bytes():
    """Generation-aware scoped-VMEM budget (fallback assumes v7x's 64 MiB per TensorCore)."""
    cap = 0
    try:
        cap = int(getattr(pltpu.get_tpu_info(), "vmem_capacity_bytes", 0) or 0)
    except Exception:
        cap = 0
    if cap <= 0:
        cap = 64 << 20
    return max(32 << 20, min(int(cap * 0.7), 96 << 20))


def _choose_tiles(N, D, K, itemsize, budget):
    """Pick (tile_n, tile_d) from a byte target + explicit VMEM accounting."""
    # VMEM per (row, feature) element of one x tile: double-buffered storage-dtype x plus the
    # in-kernel f32 upcast and f32 square temporaries (xf, xf*xf).
    per_elem = 2 * itemsize + 8

    # Single D block unless rows are wide (>32 KiB): then stream D in ~8 KiB chunks along an
    # "arbitrary" grid axis with resident accumulators so per-step VMEM stays bounded.
    if D * itemsize <= 32 * 1024:
        tile_d = D
    else:
        tile_d = max(128, (8192 // itemsize) // 128 * 128)

    # Byte-targeted row tile: ~4 MiB of x per grid step (amortizes the ~0.35 us per-step
    # overhead; multi-MiB tiles measure ~85% of HBM roofline), clamped to data + VMEM budget.
    target_x_bytes = 4 << 20
    tile_n = _round_up(max(128, target_x_bytes // max(1, tile_d * itemsize)), 128)
    tile_n = min(tile_n, _round_up(N, 128))

    fixed = 2 * K * tile_d * itemsize + (2 << 20)        # cneg2 buffers + misc headroom
    per_row = tile_d * per_elem + (3 * K + 4) * 4        # x+temps, out (2x), accumulators
    max_rows = (budget - fixed) // per_row
    tile_n_cap = max(128, (max_rows // 128) * 128)
    return min(tile_n, tile_n_cap), tile_d


def _clustering_kernel(x_ref, cneg2_ref, csq_ref, qt_ref, cross_acc, xsq_acc, *,
                       alpha, approx_recip, n_rows, n_cols, mask_rows, mask_cols):
    # x_ref:     (tile_n, tile_d)  input tile (storage dtype, f32 or bf16)
    # cneg2_ref: (K, tile_d)       -2 * cluster centers slab (zero-padded along D if ragged)
    # csq_ref:   (K, 1)            ||c_k||^2 in f32 (resident across the whole grid)
    # qt_ref:    (K, tile_n)       transposed soft assignments (lane axis = samples)
    # cross_acc: (K, tile_n) f32   running -2 x.c       (resident across the D axis)
    # xsq_acc:   (1, tile_n) f32   running ||x||^2      (resident across the D axis)
    kd = pl.program_id(1)

    @pl.when(kd == 0)
    def _():
        cross_acc[...] = jnp.zeros_like(cross_acc)
        xsq_acc[...] = jnp.zeros_like(xsq_acc)

    x = x_ref[...]
    tile_n, tile_d = x.shape

    # Zero-mask ragged tails (cheap VPU selects, hidden under the x DMA).  Garbage tail rows
    # would only pollute their own (discarded) output columns, but garbage tail FEATURES
    # would pollute every column of the reduction, so they must be masked.
    if mask_rows or mask_cols:
        keep = None
        if mask_rows:
            row0 = pl.program_id(0) * tile_n
            rid = lax.broadcasted_iota(jnp.int32, (tile_n, tile_d), 0)
            keep = rid < (n_rows - row0)
        if mask_cols:
            col0 = kd * tile_d
            cid = lax.broadcasted_iota(jnp.int32, (tile_n, tile_d), 1)
            cmask = cid < (n_cols - col0)
            keep = cmask if keep is None else jnp.logical_and(keep, cmask)
        x = jnp.where(keep, x, jnp.zeros_like(x))

    # -2 * x.c computed transposed so samples land on the lane axis; dot_general contracts
    # dim 1 of both operands, so no transposed copy of the cluster slab is materialized.
    cross_acc[...] += lax.dot_general(
        cneg2_ref[...], x, (((1,), (1,)), ((), ())),
        preferred_element_type=jnp.float32)

    # ||x||^2 as a (1, tile_n) row via a ones contraction on the MXU: result is already
    # lane-major (a lane-reduce would give (tile_n, 1) and need a relayout), and the f32
    # upcast + square temporaries are bounded by tile_d.
    xf = x.astype(jnp.float32)
    ones_row = jnp.ones((1, tile_d), jnp.float32)
    xsq_acc[...] += lax.dot_general(
        ones_row, xf * xf, (((1,), (1,)), ((), ())),
        preferred_element_type=jnp.float32)

    @pl.when(kd == pl.num_programs(1) - 1)
    def _():
        # ||x - c||^2 = ||x||^2 + ||c||^2 - 2 x.c (clamp guards cancellation near centroids).
        dist = jnp.maximum(csq_ref[...] + xsq_acc[...] + cross_acc[...], 0.0)
        if alpha != 1.0:
            dist = dist * (1.0 / alpha)
        q = 1.0 / (1.0 + dist)
        power = (alpha + 1.0) / 2.0
        if power != 1.0:
            q = q ** power
        # Per-sample normalization: samples are columns -> cheap sublane reduce over K.
        denom = jnp.sum(q, axis=0, keepdims=True)
        qt_ref[...] = (q * pl.reciprocal(denom, approx=approx_recip)).astype(qt_ref.dtype)


def clustering_layer(x, clusters, alpha=1.0, *, tile_n=None, tile_d=None,
                     transposed_output=False, approx_recip=False):
    """x: (N, D), clusters: (K, D) -> q: (N, K) f32 (or (K, N) if transposed_output=True)."""
    N, D = x.shape
    K, Dc = clusters.shape
    assert D == Dc
    alpha = float(alpha)

    # Cluster-side precompute (tiny).  On dtype mismatch we downcast the (K, D) cluster
    # operand to x's storage dtype (NOT upcast x): the dominant HBM read stays at bf16 width.
    # ||c||^2 is kept in exact f32.
    c32 = clusters.astype(jnp.float32)
    cneg2 = (-2.0 * c32).astype(x.dtype)               # exact power-of-two scaling
    csq = jnp.sum(c32 * c32, axis=1, keepdims=True)    # (K, 1) f32

    itemsize = x.dtype.itemsize
    budget = _vmem_budget_bytes()

    if tile_n is None or tile_d is None:
        auto_tn, auto_td = _choose_tiles(N, D, K, itemsize, budget)
        if tile_n is None:
            tile_n = auto_tn
        if tile_d is None:
            tile_d = auto_td
    tile_n = max(128, _round_up(int(tile_n), 128))
    tile_d = int(tile_d)
    if tile_d >= D:
        tile_d = D                      # single D block (last dim == full array dim)
    else:
        tile_d = max(128, (tile_d // 128) * 128)

    n_row_blocks = pl.cdiv(N, tile_n)
    n_d_blocks = pl.cdiv(D, tile_d)
    mask_rows = (n_row_blocks * tile_n != N)    # ragged last row tile -> zero-mask in kernel
    mask_cols = (n_d_blocks * tile_d != D)      # ragged last feature tile -> zero-mask
    if mask_cols:
        # Zero-pad only the tiny cluster slab so its D blocks are always full/finite;
        # the big x operand is never padded (no extra HBM pass).
        cneg2 = jnp.pad(cneg2, ((0, 0), (0, n_d_blocks * tile_d - D)))

    power = (alpha + 1.0) / 2.0
    cost = pl.CostEstimate(
        flops=int(2 * N * K * D + 3 * N * D + 8 * N * K),
        transcendentals=int(N * K * (2 if power != 1.0 else 1)),
        bytes_accessed=int(N * D * itemsize + K * n_d_blocks * tile_d * cneg2.dtype.itemsize
                           + K * 4 + K * N * 4),
    )

    kernel = functools.partial(
        _clustering_kernel, alpha=alpha, approx_recip=approx_recip,
        n_rows=N, n_cols=D, mask_rows=mask_rows, mask_cols=mask_cols)

    # TODO(synk): confirm in xprof that the "parallel" row axis is split across both v7x
    # TensorCores; if not, switch to pltpu.CORE_PARALLEL / an explicit core axis.
    qt = pl.pallas_call(
        kernel,
        out_shape=jax.ShapeDtypeStruct((K, N), jnp.float32),
        grid_spec=pltpu.PrefetchScalarGridSpec(
            num_scalar_prefetch=0,
            grid=(n_row_blocks, n_d_blocks),
            in_specs=[
                pl.BlockSpec((tile_n, tile_d), lambda i, k: (i, k)),   # x tile (pipelined)
                pl.BlockSpec((K, tile_d), lambda i, k: (0, k)),        # -2*C slab
                pl.BlockSpec((K, 1), lambda i, k: (0, 0)),             # ||c||^2 (resident)
            ],
            out_specs=pl.BlockSpec((K, tile_n), lambda i, k: (0, i)),  # lane-dense output
            scratch_shapes=[
                pltpu.VMEM((K, tile_n), jnp.float32),   # cross accumulator (over D axis)
                pltpu.VMEM((1, tile_n), jnp.float32),   # ||x||^2 accumulator
            ],
        ),
        compiler_params=pltpu.CompilerParams(
            dimension_semantics=("parallel", "arbitrary"),
            vmem_limit_bytes=int(budget),
        ),
        cost_estimate=cost,
    )(x, cneg2, csq)

    if transposed_output:
        return qt           # (K, N): lane-dense, no extra transpose pass
    return qt.T             # (N, K): matches the PyTorch module contract


def _reference(x, clusters, alpha=1.0):
    # Pure-JAX reference mirroring the PyTorch forward exactly.
    q_denom = (x[:, None, :] - clusters[None, :, :]) ** 2
    q_denom = q_denom.sum(axis=2)
    q_denom = q_denom / alpha
    q_denom = q_denom + 1.0
    q = 1.0 / q_denom
    q = q ** ((alpha + 1.0) / 2.0)
    q = q / q.sum(axis=1, keepdims=True)
    return q


if __name__ == "__main__":
    n_clusters = 10
    alpha = 1.0

    key = jax.random.PRNGKey(0)
    k_x, k_c, k_x2, k_x3, k_c3 = jax.random.split(key, 5)

    # Small shapes consistent with the module contract: x (n_samples, n_features).
    n_samples, n_features = 8, 32
    x = jax.random.normal(k_x, (n_samples, n_features), dtype=jnp.float32)

    # Deterministic Xavier-uniform-style init of cluster centers, matching
    # nn.init.xavier_uniform_ on a (n_clusters, input_dim) parameter.
    bound = (6.0 / (n_clusters + n_features)) ** 0.5
    clusters = jax.random.uniform(
        k_c, (n_clusters, n_features), dtype=jnp.float32, minval=-bound, maxval=bound)

    q = jax.block_until_ready(clustering_layer(x, clusters, alpha=alpha))
    q_ref = _reference(x, clusters, alpha=alpha)
    assert q.shape == (n_samples, n_clusters)
    assert jnp.allclose(q, q_ref, atol=1e-5, rtol=1e-5)

    # Ragged row tiles with no jnp.pad of x: 300 rows over 128-row tiles (3 blocks, masked tail).
    x2 = jax.random.normal(k_x2, (300, n_features), dtype=jnp.float32)
    q2 = jax.block_until_ready(clustering_layer(x2, clusters, alpha=alpha, tile_n=128))
    q2_ref = _reference(x2, clusters, alpha=alpha)
    assert q2.shape == (300, n_clusters)
    assert jnp.allclose(q2, q2_ref, atol=1e-5, rtol=1e-5)

    # D-streaming path (ragged reduction axis + resident accumulators), forced at small D.
    n3, d3 = 136, 200
    x3 = jax.random.normal(k_x3, (n3, d3), dtype=jnp.float32)
    bound3 = (6.0 / (n_clusters + d3)) ** 0.5
    clusters3 = jax.random.uniform(
        k_c3, (n_clusters, d3), dtype=jnp.float32, minval=-bound3, maxval=bound3)
    q3 = jax.block_until_ready(clustering_layer(x3, clusters3, alpha=alpha, tile_d=128))
    q3_ref = _reference(x3, clusters3, alpha=alpha)
    assert q3.shape == (n3, n_clusters)
    assert jnp.allclose(q3, q3_ref, atol=1e-5, rtol=1e-5)

    # bf16 activations with f32 cluster params: cluster side is downcast (x stays bf16 in HBM).
    x_bf16 = x2.astype(jnp.bfloat16)
    q4 = jax.block_until_ready(clustering_layer(x_bf16, clusters, alpha=alpha))
    q4_ref = _reference(x_bf16.astype(jnp.float32), clusters, alpha=alpha)
    assert q4.shape == (300, n_clusters)
    assert jnp.allclose(q4, q4_ref, atol=5e-3, rtol=5e-2)

    print("KERNEL_OK")
</pallas_src>

<mosaic_0001>
module attributes {stable_mosaic.version = 11 : i64} {
  func.func @_clustering_kernel(%arg0: i32, %arg1: i32, %arg2: memref<128x32xf32, #tpu.memory_space<vmem>>, %arg3: memref<10x32xf32, #tpu.memory_space<vmem>>, %arg4: memref<10x1xf32, #tpu.memory_space<vmem>>, %arg5: memref<10x128xf32, #tpu.memory_space<vmem>>, %arg6: memref<10x128xf32, #tpu.memory_space<vmem>>, %arg7: memref<1x128xf32, #tpu.memory_space<vmem>>) attributes {dimension_semantics = [#tpu.dimension_semantics<parallel>, #tpu.dimension_semantics<arbitrary>], iteration_bounds = array<i64: 1, 1>, scalar_prefetch = 0 : i64, scratch_operands = 2 : i64, tpu.core_type = #tpu.core_type<tc>, window_params = [{transform_indices = @transform_0, window_bounds = array<i64: 128, 32>}, {transform_indices = @transform_1, window_bounds = array<i64: 10, 32>}, {pipeline_mode = #tpu.pipeline_mode<synchronous>, transform_indices = @transform_2, window_bounds = array<i64: 10, 1>}, {transform_indices = @transform_3, window_bounds = array<i64: 10, 128>}]} {
    %c0_i32 = arith.constant 0 : i32
    %0 = arith.cmpi eq, %arg1, %c0_i32 : i32
    %1 = arith.extui %0 : i1 to i32
    %c0_i32_0 = arith.constant 0 : i32
    %2 = arith.cmpi ne, %1, %c0_i32_0 : i32
    scf.if %2 {
      %cst_17 = arith.constant 0.000000e+00 : f32
      %25 = vector.broadcast %cst_17 : f32 to vector<10x128xf32>
      %c0_18 = arith.constant 0 : index
      %c0_19 = arith.constant 0 : index
      %26 = vector.load %arg6[%c0_18, %c0_19] : memref<10x128xf32, #tpu.memory_space<vmem>>, vector<10x128xf32>
      tpu.vector_store %arg6[%c0_18, %c0_19], %25 {strides = array<i32>} : memref<10x128xf32, #tpu.memory_space<vmem>>, vector<10x128xf32>,
      %cst_20 = arith.constant 0.000000e+00 : f32
      %27 = vector.broadcast %cst_20 : f32 to vector<1x128xf32>
      %c0_21 = arith.constant 0 : index
      %c0_22 = arith.constant 0 : index
      %28 = vector.load %arg7[%c0_21, %c0_22] : memref<1x128xf32, #tpu.memory_space<vmem>>, vector<1x128xf32>
      tpu.vector_store %arg7[%c0_21, %c0_22], %27 {strides = array<i32>} : memref<1x128xf32, #tpu.memory_space<vmem>>, vector<1x128xf32>,
    } else {
    }
    %c0 = arith.constant 0 : index
    %c0_1 = arith.constant 0 : index
    %3 = vector.load %arg2[%c0, %c0_1] : memref<128x32xf32, #tpu.memory_space<vmem>>, vector<128x32xf32>
    %c128_i32 = arith.constant 128 : i32
    %4 = arith.muli %arg0, %c128_i32 : i32
    %5 = tpu.iota {dimensions = array<i32: 0>} : vector<128x32xi32>
    %c8_i32 = arith.constant 8 : i32
    %6 = arith.subi %c8_i32, %4 : i32
    %7 = vector.broadcast %6 : i32 to vector<128x32xi32>
    %8 = arith.cmpi slt, %5, %7 : vector<128x32xi32>
    %cst = arith.constant 0.000000e+00 : f32
    %9 = vector.broadcast %cst : f32 to vector<128x32xf32>
    %10 = arith.select %8, %3, %9 : vector<128x32xi1>, vector<128x32xf32>
    %c0_2 = arith.constant 0 : index
    %c0_3 = arith.constant 0 : index
    %11 = vector.load %arg6[%c0_2, %c0_3] : memref<10x128xf32, #tpu.memory_space<vmem>>, vector<10x128xf32>
    %c0_4 = arith.constant 0 : index
    %c0_5 = arith.constant 0 : index
    %12 = vector.load %arg3[%c0_4, %c0_5] : memref<10x32xf32, #tpu.memory_space<vmem>>, vector<10x32xf32>
    %cst_6 = arith.constant dense<0.000000e+00> : vector<10x128xf32>
    %13 = tpu.matmul %12, %10, %cst_6 {dimension_numbers = #tpu.dot_dimension_numbers<[1], [1], [0], [0], [0, 0, 1, 0], [], []>} : vector<10x32xf32>, vector<128x32xf32>, vector<10x128xf32> -> vector<10x128xf32>
    %14 = arith.addf %11, %13 : vector<10x128xf32>
    %c0_7 = arith.constant 0 : index
    %c0_8 = arith.constant 0 : index
    %15 = vector.load %arg6[%c0_7, %c0_8] : memref<10x128xf32, #tpu.memory_space<vmem>>, vector<10x128xf32>
    tpu.vector_store %arg6[%c0_7, %c0_8], %14 {strides = array<i32>} : memref<10x128xf32, #tpu.memory_space<vmem>>, vector<10x128xf32>,
    %cst_9 = arith.constant 1.000000e+00 : f32
    %16 = vector.broadcast %cst_9 : f32 to vector<1x32xf32>
    %c0_10 = arith.constant 0 : index
    %c0_11 = arith.constant 0 : index
    %17 = vector.load %arg7[%c0_10, %c0_11] : memref<1x128xf32, #tpu.memory_space<vmem>>, vector<1x128xf32>
    %18 = arith.mulf %10, %10 : vector<128x32xf32>
    %cst_12 = arith.constant dense<0.000000e+00> : vector<1x128xf32>
    %19 = tpu.matmul %16, %18, %cst_12 {dimension_numbers = #tpu.dot_dimension_numbers<[1], [1], [0], [0], [0, 0, 1, 0], [], []>} : vector<1x32xf32>, vector<128x32xf32>, vector<1x128xf32> -> vector<1x128xf32>
    %20 = arith.addf %17, %19 : vector<1x128xf32>
    %c0_13 = arith.constant 0 : index
    %c0_14 = arith.constant 0 : index
    %21 = vector.load %arg7[%c0_13, %c0_14] : memref<1x128xf32, #tpu.memory_space<vmem>>, vector<1x128xf32>
    tpu.vector_store %arg7[%c0_13, %c0_14], %20 {strides = array<i32>} : memref<1x128xf32, #tpu.memory_space<vmem>>, vector<1x128xf32>,
    %c0_i32_15 = arith.constant 0 : i32
    %22 = arith.cmpi eq, %arg1, %c0_i32_15 : i32
    %23 = arith.extui %22 : i1 to i32
    %c0_i32_16 = arith.constant 0 : i32
    %24 = arith.cmpi ne, %23, %c0_i32_16 : i32
    scf.if %24 {
      %c0_17 = arith.constant 0 : index
      %c0_18 = arith.constant 0 : index
      %25 = vector.load %arg4[%c0_17, %c0_18] : memref<10x1xf32, #tpu.memory_space<vmem>>, vector<10x1xf32>
      %c0_19 = arith.constant 0 : index
      %c0_20 = arith.constant 0 : index
      %26 = vector.load %arg7[%c0_19, %c0_20] : memref<1x128xf32, #tpu.memory_space<vmem>>, vector<1x128xf32>
      %27 = vector.broadcast %25 : vector<10x1xf32> to vector<10x128xf32>
      %28 = vector.broadcast %26 : vector<1x128xf32> to vector<10x128xf32>
      %29 = arith.addf %27, %28 : vector<10x128xf32>
      %c0_21 = arith.constant 0 : index
      %c0_22 = arith.constant 0 : index
      %30 = vector.load %arg6[%c0_21, %c0_22] : memref<10x128xf32, #tpu.memory_space<vmem>>, vector<10x128xf32>
      %31 = arith.addf %29, %30 : vector<10x128xf32>
      %cst_23 = arith.constant 0.000000e+00 : f32
      %32 = vector.broadcast %cst_23 : f32 to vector<10x128xf32>
      %33 = arith.maximumf %31, %32 : vector<10x128xf32>
      %cst_24 = arith.constant 1.000000e+00 : f32
      %34 = vector.broadcast %cst_24 : f32 to vector<10x128xf32>
      %35 = arith.addf %34, %33 : vector<10x128xf32>
      %cst_25 = arith.constant 1.000000e+00 : f32
      %36 = vector.broadcast %cst_25 : f32 to vector<10x128xf32>
      %37 = arith.divf %36, %35 : vector<10x128xf32>
      %cst_26 = arith.constant dense<0.000000e+00> : vector<128xf32>
      %38 = vector.multi_reduction <add>, %37, %cst_26 [0] : vector<10x128xf32> to vector<128xf32>
      %39 = vector.shape_cast %38 : vector<128xf32> to vector<1x128xf32>
      %40 = tpu.reciprocal %39 : vector<1x128xf32> -> vector<1x128xf32>
      %41 = vector.broadcast %40 : vector<1x128xf32> to vector<10x128xf32>
      %42 = arith.mulf %37, %41 : vector<10x128xf32>
      %c0_27 = arith.constant 0 : index
      %c0_28 = arith.constant 0 : index
      %43 = vector.load %arg5[%c0_27, %c0_28] : memref<10x128xf32, #tpu.memory_space<vmem>>, vector<10x128xf32>
      tpu.vector_store %arg5[%c0_27, %c0_28], %42 {strides = array<i32>} : memref<10x128xf32, #tpu.memory_space<vmem>>, vector<10x128xf32>,
    } else {
    }
    return
  }
  func.func @transform_0(%arg0: i32, %arg1: i32) -> (i32, i32) {
    %c0_i32 = arith.constant 0 : i32
    return %arg0, %arg1 : i32, i32
  }
  func.func @transform_1(%arg0: i32, %arg1: i32) -> (i32, i32) {
    %c0_i32 = arith.constant 0 : i32
    %c0_i32_0 = arith.constant 0 : i32
    return %c0_i32, %arg1 : i32, i32
  }
  func.func @transform_2(%arg0: i32, %arg1: i32) -> (i32, i32) {
    %c0_i32 = arith.constant 0 : i32
    %c0_i32_0 = arith.constant 0 : i32
    %c0_i32_1 = arith.constant 0 : i32
    return %c0_i32, %c0_i32_0 : i32, i32
  }
  func.func @transform_3(%arg0: i32, %arg1: i32) -> (i32, i32) {
    %c0_i32 = arith.constant 0 : i32
    %c0_i32_0 = arith.constant 0 : i32
    return %c0_i32, %arg0 : i32, i32
  }
}

</mosaic_0001>

<llo_original>
// kernel: tpu_custom_call.1
$region0: #{tpu_custom_call.1}
  #allocation0 [shape = 'u32[]', space=smem, size = 0x4, offset = 0x4, fixed_abs, tag = 'smem constant byte address 0x4 - core index']
  #allocation1 [shape = 'u32[144,128]{1,0:T(1,128)}', space=vmem, size = 0x12000, scoped, tag = 'internal scratch']
  #allocation2 [shape = 'f32[10,128]{1,0:T(8,128)}', space=vmem, size = 0x2000, scoped, tag = 'scratch operand']
  #allocation3 [shape = 'f32[1,128]{1,0:T(1,128)}', space=vmem, size = 0x200, scoped, tag = 'scratch operand']
  %s0 = inlined_call_operand.hbm [shape: f32[8,32], index: 0, kind: input, shape index: {}]
  %s1 = inlined_call_operand.vmem [shape: f32[10,32], index: 1, kind: input, shape index: {}]
  %s2 = inlined_call_operand.vmem [shape: f32[10,1], index: 2, kind: input, shape index: {}]
  %s3 = inlined_call_operand.vmem [shape: f32[10,8], index: 3, kind: output, shape index: {}]
  %s4 = sld [smem:[#allocation0]]
  $region34: #{tpu_custom_call.1} parent=0
    _
  %s6 = ssub.s32 1, %s4
  %s7 = scalar_select 0, %s6, %s4
  $region1: #{tpu_custom_call.1} parent=0
    #allocation4 [shape = 'u8[65536]{0}', space=vmem, size = 0x10000, scoped, tag = 'input window, operand 0, single buffered']
    #allocation5 [shape = 's32[1]{0}', space=sflag, size = 0x4, scoped, tag = 'scoped memory for tpu_custom_call.1']
    %8 = vsyncpa [#allocation5], 0
    // Predicated region
    $region2: #{tpu_custom_call.1} parent=1 // pred_check
      _
    $region3: #{tpu_custom_call.1} parent=1 // pred_check_branch
      %10 = sbr.rel (0) target = $region5
    $region4: #{tpu_custom_call.1} parent=1 // pred_region
      %s12 = ssub.s32 2048, 128
      %13 = vsyncadd [#allocation5], %s12
      %s14 = sshll.u32 [#allocation4], 4
      %s15 = int_to_ptr.vmem [resolvable:$true] %s14
      %20 = dma.hbm_to_vmem [thread:$0]  %s0, 128, %s15, [#allocation5], 128, 128, 8
    $region5: #{tpu_custom_call.1} parent=1 // pred_fallthru
      _
    // Predicated region
    $region6: #{tpu_custom_call.1} parent=1 // pred_check
      _
    $region7: #{tpu_custom_call.1} parent=1 // pred_check_branch
      %22 = sbr.rel (0) target = $region9
    $region8: #{tpu_custom_call.1} parent=1 // pred_region
      _
    $region9: #{tpu_custom_call.1} parent=1 // pred_fallthru
      _
    // Predicated region
    $region10: #{tpu_custom_call.1} parent=1 // pred_check
      _
    $region11: #{tpu_custom_call.1} parent=1 // pred_check_branch
      %24 = sbr.rel (0) target = $region13
    $region12: #{tpu_custom_call.1} parent=1 // pred_region
      _
    $region13: #{tpu_custom_call.1} parent=1 // pred_fallthru
      _
    // Predicated region
    $region14: #{tpu_custom_call.1} parent=1 // pred_check
      _
    $region15: #{tpu_custom_call.1} parent=1 // pred_check_branch
      %26 = sbr.rel (0) target = $region17
    $region16: #{tpu_custom_call.1} parent=1 // pred_region
      %27 = dma.done [#allocation5], 2048
    $region17: #{tpu_custom_call.1} parent=1 // pred_fallthru
      _
    %p28 = scmp.eq.s32.totalorder 0, 0
    // Predicated region
    $region18: #{tpu_custom_call.1} parent=1 // pred_check
      %p29 = pneg %p28
    $region19: #{tpu_custom_call.1} parent=1 // pred_check_branch
      %31 = sbr.rel (%p29) target = $region21
    $region20: #{tpu_custom_call.1} parent=1 // pred_region
      %32 = vst [vmem:[#allocation2] sm:$0xff] 0.0
      %33 = vst [vmem:[#allocation2 + $0x8] sm:$0x3] 0.0
      %34 = vst [vmem:[#allocation3] sm:$0x1] 0.0
    $region21: #{tpu_custom_call.1} parent=1 // pred_fallthru
      _
    %v35 = vld [vmem:[#allocation4] sm:$0xff]
    %v36 = vld [vmem:[#allocation4 + $0x8] sm:$0xff]
    %v37 = vld [vmem:[#allocation4 + $0x10] sm:$0xff]
    %v38 = vld [vmem:[#allocation4 + $0x18] sm:$0xff]
    %v39 = vld [vmem:[#allocation4 + $0x20] sm:$0xff]
    %v40 = vld [vmem:[#allocation4 + $0x28] sm:$0xff]
    %v41 = vld [vmem:[#allocation4 + $0x30] sm:$0xff]
    %v42 = vld [vmem:[#allocation4 + $0x38] sm:$0xff]
    %v43 = vld [vmem:[#allocation4 + $0x40] sm:$0xff]
    %v44 = vld [vmem:[#allocation4 + $0x48] sm:$0xff]
    %v45 = vld [vmem:[#allocation4 + $0x50] sm:$0xff]
    %v46 = vld [vmem:[#allocation4 + $0x58] sm:$0xff]
    %v47 = vld [vmem:[#allocation4 + $0x60] sm:$0xff]
    %v48 = vld [vmem:[#allocation4 + $0x68] sm:$0xff]
    %v49 = vld [vmem:[#allocation4 + $0x70] sm:$0xff]
    %v50 = vld [vmem:[#allocation4 + $0x78] sm:$0xff]
    %s51 = smul.u32 0, 128
    %v52 = vlaneseq
    %v53 = vshrl.u32 %v52, 7
    %v54 = vadd.s32 %v53, 8
    %v55 = vadd.s32 %v53, 16
    %v56 = vadd.s32 %v53, 24
    %v57 = vadd.s32 %v53, 32
    %v58 = vadd.s32 %v53, 40
    %v59 = vadd.s32 %v53, 48
    %v60 = vadd.s32 %v53, 56
    %v61 = vadd.s32 %v53, 64
    %v62 = vadd.s32 %v53, 72
    %v63 = vadd.s32 %v53, 80
    %v64 = vadd.s32 %v53, 88
    %v65 = vadd.s32 %v53, 96
    %v66 = vadd.s32 %v53, 104
    %v67 = vadd.s32 %v53, 112
    %v68 = vadd.s32 %v53, 120
    %s69 = ssub.s32 8, %s51
    %v70 = vstv %s69
    %vm71 = vcmp.lt.s32.totalorder %v53, %v70
    %vm72 = vcmp.lt.s32.totalorder %v54, %v70
    %vm73 = vcmp.lt.s32.totalorder %v55, %v70
    %vm74 = vcmp.lt.s32.totalorder %v56, %v70
    %vm75 = vcmp.lt.s32.totalorder %v57, %v70
    %vm76 = vcmp.lt.s32.totalorder %v58, %v70
    %vm77 = vcmp.lt.s32.totalorder %v59, %v70
    %vm78 = vcmp.lt.s32.totalorder %v60, %v70
    %vm79 = vcmp.lt.s32.totalorder %v61, %v70
    %vm80 = vcmp.lt.s32.totalorder %v62, %v70
    %vm81 = vcmp.lt.s32.totalorder %v63, %v70
    %vm82 = vcmp.lt.s32.totalorder %v64, %v70
    %vm83 = vcmp.lt.s32.totalorder %v65, %v70
    %vm84 = vcmp.lt.s32.totalorder %v66, %v70
    %vm85 = vcmp.lt.s32.totalorder %v67, %v70
    %vm86 = vcmp.lt.s32.totalorder %v68, %v70
    %v87 = vsel %vm71, %v35, 0.0
    %v88 = vsel %vm72, %v36, 0.0
    %v89 = vsel %vm73, %v37, 0.0
    %v90 = vsel %vm74, %v38, 0.0
    %v91 = vsel %vm75, %v39, 0.0
    %v92 = vsel %vm76, %v40, 0.0
    %v93 = vsel %vm77, %v41, 0.0
    %v94 = vsel %vm78, %v42, 0.0
    %v95 = vsel %vm79, %v43, 0.0
    %v96 = vsel %vm80, %v44, 0.0
    %v97 = vsel %vm81, %v45, 0.0
    %v98 = vsel %vm82, %v46, 0.0
    %v99 = vsel %vm83, %v47, 0.0
    %v100 = vsel %vm84, %v48, 0.0
    %v101 = vsel %vm85, %v49, 0.0
    %v102 = vsel %vm86, %v50, 0.0
    %v103 = vld [vmem:[#allocation2] sm:$0xff]
    %v104 = vld [vmem:[#allocation2 + $0x8] sm:$0x3]
    %v105 = vld [vmem:[%s1] sm:$0xff]
    %v106 = vld [vmem:[%s1 + $0x8] sm:$0x3]
    %vm107 = vcmask 261120
    %v109 = vsel %vm107, %v105, 0
    %v112 = vsel %vm107, %v106, 0
    %v115 = vsel %vm107, %v87, 0
    %v118 = vsel %vm107, %v88, 0
    %v121 = vsel %vm107, %v89, 0
    %v124 = vsel %vm107, %v90, 0
    %v127 = vsel %vm107, %v91, 0
    %v130 = vsel %vm107, %v92, 0
    %v133 = vsel %vm107, %v93, 0
    %v136 = vsel %vm107, %v94, 0
    %v139 = vsel %vm107, %v95, 0
    %v142 = vsel %vm107, %v96, 0
    %v145 = vsel %vm107, %v97, 0
    %v148 = vsel %vm107, %v98, 0
    %v151 = vsel %vm107, %v99, 0
    %v154 = vsel %vm107, %v100, 0
    %v157 = vsel %vm107, %v101, 0
    %v160 = vsel %vm107, %v102, 0
    %162 = vmatprep.subr.mxu0 0.0
    %163 = vmatpush1.xpose.msra.mxu0 %v115
    %164 = vmatprep.subr.mxu0 0.0
    %165 = vmatpush1.xpose.msra.mxu0 %v118
    %166 = vmatprep.subr.mxu0 0.0
    %167 = vmatpush1.xpose.msra.mxu0 %v121
    %168 = vmatprep.subr.mxu0 0.0
    %169 = vmatpush1.xpose.msra.mxu0 %v124
    %170 = vmatprep.subr.mxu0 0.0
    %171 = vmatpush1.xpose.msra.mxu0 %v127
    %172 = vmatprep.subr.mxu0 0.0
    %173 = vmatpush1.xpose.msra.mxu0 %v130
    %174 = vmatprep.subr.mxu0 0.0
    %175 = vmatpush1.xpose.msra.mxu0 %v133
    %176 = vmatprep.subr.mxu0 0.0
    %177 = vmatpush1.xpose.msra.mxu0 %v136
    %178 = vmatprep.subr.mxu0 0.0
    %179 = vmatpush1.xpose.msra.mxu0 %v139
    %180 = vmatprep.subr.mxu0 0.0
    %181 = vmatpush1.xpose.msra.mxu0 %v142
    %182 = vmatprep.subr.mxu0 0.0
    %183 = vmatpush1.xpose.msra.mxu0 %v145
    %184 = vmatprep.subr.mxu0 0.0
    %185 = vmatpush1.xpose.msra.mxu0 %v148
    %186 = vmatprep.subr.mxu0 0.0
    %187 = vmatpush1.xpose.msra.mxu0 %v151
    %188 = vmatprep.subr.mxu0 0.0
    %189 = vmatpush1.xpose.msra.mxu0 %v154
    %190 = vmatprep.subr.mxu0 0.0
    %191 = vmatpush1.xpose.msra.mxu0 %v157
    %192 = vmatprep.subr.mxu0 0.0
    %193 = vmatpush1.xpose.msra.mxu0 %v160
    %194 = vmatprep.subr.mxu0 0.0
    %195 = vmatpush1.xpose.msra.mxu0 0.0
    %196 = vmatprep.subr.mxu0 0.0
    %197 = vmatpush1.xpose.msra.mxu0 0.0
    %198 = vmatprep.subr.mxu0 0.0
    %199 = vmatpush1.xpose.msra.mxu0 0.0
    %200 = vmatprep.subr.mxu0 0.0
    %201 = vmatpush1.xpose.msra.mxu0 0.0
    %202 = vmatprep.subr.mxu0 0.0
    %203 = vmatpush1.xpose.msra.mxu0 0.0
    %204 = vmatprep.subr.mxu0 0.0
    %205 = vmatpush1.xpose.msra.mxu0 0.0
    %206 = vmatprep.subr.mxu0 0.0
    %207 = vmatpush1.xpose.msra.mxu0 0.0
    %208 = vmatprep.subr.mxu0 0.0
    %209 = vmatpush1.xpose.msra.mxu0 0.0
    %210 = vmatprep.subr.mxu0 0.0
    %211 = vmatpush1.xpose.msra.mxu0 0.0
    %212 = vmatprep.subr.mxu0 0.0
    %213 = vmatpush1.xpose.msra.mxu0 0.0
    %214 = vmatprep.subr.mxu0 0.0
    %215 = vmatpush1.xpose.msra.mxu0 0.0
    %216 = vmatprep.subr.mxu0 0.0
    %217 = vmatpush1.xpose.msra.mxu0 0.0
    %218 = vmatprep.subr.mxu0 0.0
    %219 = vmatpush1.xpose.msra.mxu0 0.0
    %220 = vmatprep.subr.mxu0 0.0
    %221 = vmatpush1.xpose.msra.mxu0 0.0
    %222 = vmatprep.subr.mxu0 0.0
    %223 = vmatpush1.xpose.msra.mxu0 0.0
    %224 = vmatprep.subr.mxu0 0.0
    %225 = vmatpush1.xpose.msra.mxu0 0.0
    %226 = vmatprep.mubr.f32.mxu0 0.0
    %227 = vmatmul.mubr.f32.gmra.mrb[0].mxu0 %v109
    %v228 = vpop.f32.mrb[0].mxu0
    %v229 = vadd.f32 0.0, %v228
    %v230 = vpop.f32.mrb[0].mxu0
    %231 = vmatprep.mubr.f32.mxu0 0.0
    %232 = vmatmul.mubr.f32.gmra.mrb[0].mxu0 %v112
    %v233 = vpop.f32.mrb[0].mxu0
    %v234 = vadd.f32 0.0, %v233
    %v235 = vpop.f32.mrb[0].mxu0
    %236 = vdwg.mxu0
    %v237 = vadd.f32 %v103, %v229
    %v238 = vadd.f32 %v104, %v234
    %239 = vst [vmem:[#allocation2] sm:$0xff] %v237
    %240 = vst [vmem:[#allocation2 + $0x8] sm:$0x3] %v238
    %v241 = vld [vmem:[#allocation3] sm:$0x1]
    %v242 = vmul.f32 %v87, %v87
    %v243 = vmul.f32 %v88, %v88
    %v244 = vmul.f32 %v89, %v89
    %v245 = vmul.f32 %v90, %v90
    %v246 = vmul.f32 %v91, %v91
    %v247 = vmul.f32 %v92, %v92
    %v248 = vmul.f32 %v93, %v93
    %v249 = vmul.f32 %v94, %v94
    %v250 = vmul.f32 %v95, %v95
    %v251 = vmul.f32 %v96, %v96
    %v252 = vmul.f32 %v97, %v97
    %v253 = vmul.f32 %v98, %v98
    %v254 = vmul.f32 %v99, %v99
    %v255 = vmul.f32 %v100, %v100
    %v256 = vmul.f32 %v101, %v101
    %v257 = vmul.f32 %v102, %v102
    %v259 = vsel %vm107, 1.0, 0
    %v262 = vsel %vm107, %v242, 0
    %v265 = vsel %vm107, %v243, 0
    %v268 = vsel %vm107, %v244, 0
    %v271 = vsel %vm107, %v245, 0
    %v274 = vsel %vm107, %v246, 0
    %v277 = vsel %vm107, %v247, 0
    %v280 = vsel %vm107, %v248, 0
    %v283 = vsel %vm107, %v249, 0
    %v286 = vsel %vm107, %v250, 0
    %v289 = vsel %vm107, %v251, 0
    %v292 = vsel %vm107, %v252, 0
    %v295 = vsel %vm107, %v253, 0
    %v298 = vsel %vm107, %v254, 0
    %v301 = vsel %vm107, %v255, 0
    %v304 = vsel %vm107, %v256, 0
    %v307 = vsel %vm107, %v257, 0
    %309 = vmatprep.subr.mxu0 0.0
    %310 = vmatpush1.xpose.msra.mxu0 %v262
    %311 = vmatprep.subr.mxu0 0.0
    %312 = vmatpush1.xpose.msra.mxu0 %v265
    %313 = vmatprep.subr.mxu0 0.0
    %314 = vmatpush1.xpose.msra.mxu0 %v268
    %315 = vmatprep.subr.mxu0 0.0
    %316 = vmatpush1.xpose.msra.mxu0 %v271
    %317 = vmatprep.subr.mxu0 0.0
    %318 = vmatpush1.xpose.msra.mxu0 %v274
    %319 = vmatprep.subr.mxu0 0.0
    %320 = vmatpush1.xpose.msra.mxu0 %v277
    %321 = vmatprep.subr.mxu0 0.0
    %322 = vmatpush1.xpose.msra.mxu0 %v280
    %323 = vmatprep.subr.mxu0 0.0
    %324 = vmatpush1.xpose.msra.mxu0 %v283
    %325 = vmatprep.subr.mxu0 0.0
    %326 = vmatpush1.xpose.msra.mxu0 %v286
    %327 = vmatprep.subr.mxu0 0.0
    %328 = vmatpush1.xpose.msra.mxu0 %v289
    %329 = vmatprep.subr.mxu0 0.0
    %330 = vmatpush1.xpose.msra.mxu0 %v292
    %331 = vmatprep.subr.mxu0 0.0
    %332 = vmatpush1.xpose.msra.mxu0 %v295
    %333 = vmatprep.subr.mxu0 0.0
    %334 = vmatpush1.xpose.msra.mxu0 %v298
    %335 = vmatprep.subr.mxu0 0.0
    %336 = vmatpush1.xpose.msra.mxu0 %v301
    %337 = vmatprep.subr.mxu0 0.0
    %338 = vmatpush1.xpose.msra.mxu0 %v304
    %339 = vmatprep.subr.mxu0 0.0
    %340 = vmatpush1.xpose.msra.mxu0 %v307
    %341 = vmatprep.subr.mxu0 0.0
    %342 = vmatpush1.xpose.msra.mxu0 0.0
    %343 = vmatprep.subr.mxu0 0.0
    %344 = vmatpush1.xpose.msra.mxu0 0.0
    %345 = vmatprep.subr.mxu0 0.0
    %346 = vmatpush1.xpose.msra.mxu0 0.0
    %347 = vmatprep.subr.mxu0 0.0
    %348 = vmatpush1.xpose.msra.mxu0 0.0
    %349 = vmatprep.subr.mxu0 0.0
    %350 = vmatpush1.xpose.msra.mxu0 0.0
    %351 = vmatprep.subr.mxu0 0.0
    %352 = vmatpush1.xpose.msra.mxu0 0.0
    %353 = vmatprep.subr.mxu0 0.0
    %354 = vmatpush1.xpose.msra.mxu0 0.0
    %355 = vmatprep.subr.mxu0 0.0
    %356 = vmatpush1.xpose.msra.mxu0 0.0
    %357 = vmatprep.subr.mxu0 0.0
    %358 = vmatpush1.xpose.msra.mxu0 0.0
    %359 = vmatprep.subr.mxu0 0.0
    %360 = vmatpush1.xpose.msra.mxu0 0.0
    %361 = vmatprep.subr.mxu0 0.0
    %362 = vmatpush1.xpose.msra.mxu0 0.0
    %363 = vmatprep.subr.mxu0 0.0
    %364 = vmatpush1.xpose.msra.mxu0 0.0
    %365 = vmatprep.subr.mxu0 0.0
    %366 = vmatpush1.xpose.msra.mxu0 0.0
    %367 = vmatprep.subr.mxu0 0.0
    %368 = vmatpush1.xpose.msra.mxu0 0.0
    %369 = vmatprep.subr.mxu0 0.0
    %370 = vmatpush1.xpose.msra.mxu0 0.0
    %371 = vmatprep.subr.mxu0 0.0
    %372 = vmatpush1.xpose.msra.mxu0 0.0
    %373 = vmatprep.mubr.f32.mxu0 0.0
    %374 = vmatmul.mubr.f32.gmra.mrb[0].mxu0 %v259
    %v375 = vpop.f32.mrb[0].mxu0
    %v376 = vadd.f32 0.0, %v375
    %v377 = vpop.f32.mrb[0].mxu0
    %378 = vdwg.mxu0
    %v379 = vadd.f32 %v241, %v376
    %380 = vst [vmem:[#allocation3] sm:$0x1] %v379
    // Predicated region
    $region22: #{tpu_custom_call.1} parent=1 // pred_check
      %p381 = pneg %p28
    $region23: #{tpu_custom_call.1} parent=1 // pred_check_branch
      %383 = sbr.rel (%p381) target = $region25
    $region24: #{tpu_custom_call.1} parent=1 // pred_region
      %v384 = vld [vmem:[%s2] sm:$0xff]
      %v385 = vld [vmem:[%s2 + $0x8] sm:$0x3]
      %v386 = vld [vmem:[#allocation3] sm:$0x1]
      %388 = vset.pattern.permute.xlu0 0
      %389 = vperm.xlu0 %388, %v384
      %v390 = vpop.permute.xlu0 %389
      %393 = vset.pattern.permute.xlu0 0
      %394 = vperm.xlu0 %393, %v385
      %v395 = vpop.permute.xlu0 %394
      %v398 = vlaneseq
      %v399 = vshrl.u32 %v398, 7
      %v400 = vsub.s32 0, %v399
      %v401 = vrot.slane %v386, %v400
      %v403 = vadd.f32 %v390, %v401
      %v404 = vadd.f32 %v395, %v401
      %v405 = vld [vmem:[#allocation2] sm:$0xff]
      %v406 = vld [vmem:[#allocation2 + $0x8] sm:$0x3]
      %v407 = vadd.f32 %v403, %v405
      %v408 = vadd.f32 %v404, %v406
      %v409 = vmax.f32 %v407, 0.0
      %v410 = vmax.f32 %v408, 0.0
      %v411 = vadd.f32 %v409, 1.0
      %v412 = vadd.f32 %v410, 1.0
      %v413 = vrcp.pop %v411
      %v414 = vmul.f32 1.0, %v413
      %v415 = vrcp.pop %v412
      %v416 = vmul.f32 1.0, %v415
      %vm417 = vcmask 1041408
      %v418 = vsel %vm417, %v416, 0.0
      %v419 = vadd.f32 %v414, %v418
      %v420 = vrot.slane %v419, 4
      %v421 = vadd.f32 %v419, %v420
      %v422 = vrot.slane %v421, 2
      %v423 = vadd.f32 %v421, %v422
      %v424 = vrot.slane %v423, 1
      %v425 = vadd.f32 %v423, %v424
      %v426 = vrcp.pop %v425
      %v427 = vmul.f32 %v414, %v426
      %v428 = vmul.f32 %v416, %v426
      %429 = vst [vmem:[%s3] sm:$0xff] %v427
      %430 = vst [vmem:[%s3 + $0x8] sm:$0x3] %v428
    $region25: #{tpu_custom_call.1} parent=1 // pred_fallthru
      _
    // Predicated region
    $region26: #{tpu_custom_call.1} parent=1 // pred_check
      _
    $region27: #{tpu_custom_call.1} parent=1 // pred_check_branch
      %432 = sbr.rel (0) target = $region29
    $region28: #{tpu_custom_call.1} parent=1 // pred_region
      _
    $region29: #{tpu_custom_call.1} parent=1 // pred_fallthru
      _
    // Predicated region
    $region30: #{tpu_custom_call.1} parent=1 // pred_check
      _
    $region31: #{tpu_custom_call.1} parent=1 // pred_check_branch
      %434 = sbr.rel (0) target = $region33
    $region32: #{tpu_custom_call.1} parent=1 // pred_region
      _
    $region33: #{tpu_custom_call.1} parent=1 // pred_fallthru
      _
    %435 = vsyncpa [#allocation5], 1

</llo_original>
